<compile_context>
chip_gen: v7x
topology: tpu7x:2x2x1
jax: 0.10.0
libtpu: 0.0.40
codegen_flags: <defaults>
</compile_context>

<pallas_src>
import functools

import jax
import jax.numpy as jnp
import numpy as np
from jax.experimental import pallas as pl
from jax.experimental.pallas import tpu as pltpu


# ---------------------------------------------------------------------------
# Kernel 1: per-node projections (features, fused attention scores, residual).
# Tiled over node-row blocks; every matmul is a wide MXU op.
# ---------------------------------------------------------------------------
def _gat_project_kernel(*refs, has_res_proj):
    if has_res_proj:
        x_ref, w_ref, a_ref, wres_ref, feat_ref, scores_ref, res_ref = refs
    else:
        x_ref, w_ref, a_ref, feat_ref, scores_ref = refs

    x = x_ref[...]                                                      # (TM, Fin)
    feat = jnp.dot(x, w_ref[...], preferred_element_type=jnp.float32)  # (TM, H*D)
    feat_ref[...] = feat
    # Fused attention scores: a_ref is block-diagonal (H*D, 2H), so one matmul
    # yields [el | er] for every head at once.
    scores_ref[...] = jnp.dot(feat, a_ref[...],
                              preferred_element_type=jnp.float32)      # (TM, 2H)
    if has_res_proj:
        res_ref[...] = jnp.dot(x, wres_ref[...],
                               preferred_element_type=jnp.float32)     # (TM, H*D)


# ---------------------------------------------------------------------------
# Kernel 2: masked edge-softmax + aggregation for a tile of destination nodes.
# mask_ref holds an ADDITIVE mask (0 for edges, -1e30 for non-edges) in bf16.
# ---------------------------------------------------------------------------
def _gat_attend_kernel(feat_ref, elt_ref, er_ref, mask_ref, res_ref, b_ref, o_ref,
                       *, num_heads, head_size, apply_act):
    H, D = num_heads, head_size
    feat = feat_ref[...]                       # (N, H*D)  all source features
    el_t = elt_ref[...]                        # (H, N)    source-side scores
    er = er_ref[...]                           # (TM, H)   destination-side scores
    mask = mask_ref[...].astype(jnp.float32)   # (TM, N)   upcast once per tile

    outs = []
    for h in range(H):                         # H is small & static -> unrolled
        e = er[:, h:h + 1] + el_t[h:h + 1, :]              # (TM, N)
        e = jnp.maximum(e, 0.2 * e) + mask                 # leaky_relu(0.2) + mask
        m = jnp.max(e, axis=-1, keepdims=True)
        p = jnp.exp(e - m)                                 # masked entries underflow to 0
        denom = jnp.sum(p, axis=-1, keepdims=True)         # >0 thanks to self-loops
        # Aggregate un-normalized probabilities, then scale once by 1/denom (EUP).
        rst = jnp.dot(p, feat[:, h * D:(h + 1) * D],
                      preferred_element_type=jnp.float32)  # (TM, D)
        outs.append(rst * pl.reciprocal(denom, approx=True))

    out = outs[0] if H == 1 else jnp.concatenate(outs, axis=-1)   # (TM, H*D)
    out = out + res_ref[...] + b_ref[...]
    if apply_act:                                          # ELU(alpha=1)
        out = jnp.where(out > 0, out, jnp.exp(out) - 1.0)
    o_ref[...] = out                                       # single lane-dense store


# ---------------------------------------------------------------------------
# One GATConv layer = two pallas_calls (projection, attention/aggregation)
# ---------------------------------------------------------------------------
def gat_conv_pallas(x, mask_bias, params, *, num_heads, head_size, apply_act,
                    tile_m=64):
    n, fin = x.shape
    H, D = num_heads, head_size
    hd = H * D
    has_res_proj = "w_res" in params

    tm = tile_m if (tile_m <= n and n % tile_m == 0) else n
    grid = (n // tm,)
    parallel = pltpu.CompilerParams(dimension_semantics=("parallel",))

    # Block-diagonal fused attention matrix: column h <- attn_l[h], column H+h <- attn_r[h].
    eye = jnp.eye(H, dtype=jnp.float32)
    a_l = (params["attn_l"][:, :, None] * eye[:, None, :]).reshape(hd, H)
    a_r = (params["attn_r"][:, :, None] * eye[:, None, :]).reshape(hd, H)
    attn_mat = jnp.concatenate([a_l, a_r], axis=1)         # (H*D, 2H)

    # ---- call 1: projections -------------------------------------------------
    in_specs = [
        pl.BlockSpec((tm, fin), lambda i: (i, 0)),         # x row tile
        pl.BlockSpec((fin, hd), lambda i: (0, 0)),         # W (resident)
        pl.BlockSpec((hd, 2 * H), lambda i: (0, 0)),       # fused attn matrix
    ]
    args = [x, params["w"], attn_mat]
    out_shape = [jax.ShapeDtypeStruct((n, hd), jnp.float32),
                 jax.ShapeDtypeStruct((n, 2 * H), jnp.float32)]
    out_specs = [pl.BlockSpec((tm, hd), lambda i: (i, 0)),
                 pl.BlockSpec((tm, 2 * H), lambda i: (i, 0))]
    if has_res_proj:
        in_specs.append(pl.BlockSpec((fin, hd), lambda i: (0, 0)))
        args.append(params["w_res"])
        out_shape.append(jax.ShapeDtypeStruct((n, hd), jnp.float32))
        out_specs.append(pl.BlockSpec((tm, hd), lambda i: (i, 0)))

    proj = pl.pallas_call(
        functools.partial(_gat_project_kernel, has_res_proj=has_res_proj),
        grid=grid,
        in_specs=in_specs,
        out_specs=tuple(out_specs),
        out_shape=tuple(out_shape),
        compiler_params=parallel,
    )(*args)
    if has_res_proj:
        feat, scores, res = proj
    else:
        feat, scores = proj
        res = x          # identity residual: no matmul, no extra weight DMA

    # Tiny layout plumbing in XLA between the two calls: split the fused scores
    # and present the source-side scores lane-major (one small (N,H)->(H,N) transpose).
    el_t = jnp.transpose(scores[:, :H])                    # (H, N)
    er = scores[:, H:]                                     # (N, H)

    # ---- call 2: attention + aggregation over destination-node tiles ---------
    out = pl.pallas_call(
        functools.partial(_gat_attend_kernel, num_heads=H, head_size=D,
                          apply_act=apply_act),
        grid=grid,
        in_specs=[
            pl.BlockSpec((n, hd), lambda i: (0, 0)),       # feat: all source nodes (resident)
            pl.BlockSpec((H, n), lambda i: (0, 0)),        # el (all source nodes, resident)
            pl.BlockSpec((tm, H), lambda i: (i, 0)),       # er (dst tile)
            pl.BlockSpec((tm, n), lambda i: (i, 0)),       # additive mask rows (bf16)
            pl.BlockSpec((tm, hd), lambda i: (i, 0)),      # residual rows for dst tile
            pl.BlockSpec((1, hd), lambda i: (0, 0)),       # bias (resident)
        ],
        out_specs=pl.BlockSpec((tm, hd), lambda i: (i, 0)),
        out_shape=jax.ShapeDtypeStruct((n, hd), jnp.float32),
        compiler_params=parallel,
    )(feat, el_t, er, mask_bias, res, params["bias"])
    return out


# ---------------------------------------------------------------------------
# GAT module: parameter init + layer stacking (glue in plain JAX)
# ---------------------------------------------------------------------------
def _layer_heads(i, num_layers, num_heads, head_size):
    if i < num_layers - 1:
        return num_heads, head_size
    return 1, num_heads * head_size


def init_gat_params(key, num_layers, input_size, num_heads, head_size):
    layers = []
    fin = input_size
    for i in range(num_layers):
        H, D = _layer_heads(i, num_layers, num_heads, head_size)
        fout = H * D
        key, k1, k2, k3, k4, k5 = jax.random.split(key, 6)
        p = dict(
            w=jax.random.normal(k1, (fin, fout), jnp.float32) / jnp.sqrt(float(fin)),
            attn_l=jax.random.normal(k2, (H, D), jnp.float32) * 0.1,
            attn_r=jax.random.normal(k3, (H, D), jnp.float32) * 0.1,
            bias=jax.random.normal(k5, (1, fout), jnp.float32) * 0.02,
        )
        if fin != fout:   # residual=True -> Linear when dims differ, else Identity
            p["w_res"] = (jax.random.normal(k4, (fin, fout), jnp.float32)
                          / jnp.sqrt(float(fin)))
        layers.append(p)
        fin = fout
    return layers


def gat_forward(adj, node_features, params_list, *, num_layers, num_heads,
                head_size, tile_m=64):
    # Build the additive softmax mask once (bf16 halves the O(N^2) HBM stream)
    # and reuse it for every layer.
    mask_bias = jnp.where(adj > 0, 0.0, -1e30).astype(jnp.bfloat16)
    h = node_features
    for i, p in enumerate(params_list):
        H, D = _layer_heads(i, num_layers, num_heads, head_size)
        act = i < num_layers - 1
        h = gat_conv_pallas(h, mask_bias, p, num_heads=H, head_size=D,
                            apply_act=act, tile_m=tile_m)
        # nn reshape(N, -1) is a no-op here: heads already concatenated on axis -1
    return h


# ---------------------------------------------------------------------------
# Pure-JAX reference for verification
# ---------------------------------------------------------------------------
def _gat_conv_ref(x, adj, p, H, D, act):
    hi = jax.lax.Precision.HIGHEST
    feat = jnp.dot(x, p["w"], precision=hi)
    res = jnp.dot(x, p["w_res"], precision=hi) if "w_res" in p else x
    outs = []
    for h in range(H):
        feat_h = feat[:, h * D:(h + 1) * D]
        el = feat_h @ p["attn_l"][h]                         # (N,)
        er = feat_h @ p["attn_r"][h]                         # (N,)
        e = er[:, None] + el[None, :]
        e = jnp.where(e > 0, e, 0.2 * e)
        e = jnp.where(adj > 0, e, -1e30)
        m = jnp.max(e, axis=-1, keepdims=True)
        pr = jnp.exp(e - m) * adj
        alpha = pr / jnp.sum(pr, axis=-1, keepdims=True)
        outs.append(jnp.dot(alpha, feat_h, precision=hi))
    out = jnp.concatenate(outs, axis=-1) + res + p["bias"]
    if act:
        out = jnp.where(out > 0, out, jnp.exp(out) - 1.0)
    return out


def gat_forward_ref(adj, x, params_list, *, num_layers, num_heads, head_size):
    h = x
    for i, p in enumerate(params_list):
        H, D = _layer_heads(i, num_layers, num_heads, head_size)
        h = _gat_conv_ref(h, adj, p, H, D, i < num_layers - 1)
    return h


if __name__ == "__main__":
    # Small deterministic problem consistent with the module's forward:
    # 3 GATConv layers, 4 heads x 32 head_size (last layer: 1 head x 128).
    N = 128
    NUM_LAYERS = 3
    INPUT_SIZE = 64
    NUM_HEADS = 4
    HEAD_SIZE = 32
    TILE_M = 64

    root = jax.random.PRNGKey(0)
    k_adj, k_x, k_p = jax.random.split(root, 3)

    # Dense adjacency mask adj[dst, src] with self-loops.
    adj = (jax.random.uniform(k_adj, (N, N)) < 0.15).astype(jnp.float32)
    adj = jnp.maximum(adj, jnp.eye(N, dtype=jnp.float32))

    node_features = jax.random.normal(k_x, (N, INPUT_SIZE), jnp.float32)
    params = init_gat_params(k_p, NUM_LAYERS, INPUT_SIZE, NUM_HEADS, HEAD_SIZE)

    out = gat_forward(adj, node_features, params, num_layers=NUM_LAYERS,
                      num_heads=NUM_HEADS, head_size=HEAD_SIZE, tile_m=TILE_M)
    out = jax.block_until_ready(out)

    ref = gat_forward_ref(adj, node_features, params, num_layers=NUM_LAYERS,
                          num_heads=NUM_HEADS, head_size=HEAD_SIZE)
    ref = jax.block_until_ready(ref)

    assert out.shape == (N, NUM_HEADS * HEAD_SIZE), out.shape
    np.testing.assert_allclose(np.asarray(out), np.asarray(ref), atol=1e-2, rtol=1e-2)

    print("KERNEL_OK")
</pallas_src>

<mosaic_0001>
module attributes {stable_mosaic.version = 11 : i64} {
  func.func @_gat_project_kernel(%arg0: i32, %arg1: memref<64x64xf32, #tpu.memory_space<vmem>>, %arg2: memref<64x128xf32, #tpu.memory_space<vmem>>, %arg3: memref<128x8xf32, #tpu.memory_space<vmem>>, %arg4: memref<64x128xf32, #tpu.memory_space<vmem>>, %arg5: memref<64x128xf32, #tpu.memory_space<vmem>>, %arg6: memref<64x8xf32, #tpu.memory_space<vmem>>, %arg7: memref<64x128xf32, #tpu.memory_space<vmem>>) attributes {dimension_semantics = [#tpu.dimension_semantics<parallel>], iteration_bounds = array<i64: 2>, scalar_prefetch = 0 : i64, scratch_operands = 0 : i64, tpu.core_type = #tpu.core_type<tc>, window_params = [{transform_indices = @transform_0, window_bounds = array<i64: 64, 64>}, {pipeline_mode = #tpu.pipeline_mode<synchronous>, transform_indices = @transform_1, window_bounds = array<i64: 64, 128>}, {pipeline_mode = #tpu.pipeline_mode<synchronous>, transform_indices = @transform_2, window_bounds = array<i64: 128, 8>}, {pipeline_mode = #tpu.pipeline_mode<synchronous>, transform_indices = @transform_3, window_bounds = array<i64: 64, 128>}, {transform_indices = @transform_4, window_bounds = array<i64: 64, 128>}, {transform_indices = @transform_5, window_bounds = array<i64: 64, 8>}, {transform_indices = @transform_6, window_bounds = array<i64: 64, 128>}]} {
    %c0 = arith.constant 0 : index
    %c0_0 = arith.constant 0 : index
    %0 = vector.load %arg1[%c0, %c0_0] : memref<64x64xf32, #tpu.memory_space<vmem>>, vector<64x64xf32>
    %c0_1 = arith.constant 0 : index
    %c0_2 = arith.constant 0 : index
    %1 = vector.load %arg2[%c0_1, %c0_2] : memref<64x128xf32, #tpu.memory_space<vmem>>, vector<64x128xf32>
    %cst = arith.constant dense<0.000000e+00> : vector<64x128xf32>
    %2 = tpu.matmul %0, %1, %cst {dimension_numbers = #tpu.dot_dimension_numbers<[1], [0], [0], [1], [0, 0, 1, 1], [], []>} : vector<64x64xf32>, vector<64x128xf32>, vector<64x128xf32> -> vector<64x128xf32>
    %c0_3 = arith.constant 0 : index
    %c0_4 = arith.constant 0 : index
    %3 = vector.load %arg5[%c0_3, %c0_4] : memref<64x128xf32, #tpu.memory_space<vmem>>, vector<64x128xf32>
    tpu.vector_store %arg5[%c0_3, %c0_4], %2 {strides = array<i32>} : memref<64x128xf32, #tpu.memory_space<vmem>>, vector<64x128xf32>,
    %c0_5 = arith.constant 0 : index
    %c0_6 = arith.constant 0 : index
    %4 = vector.load %arg3[%c0_5, %c0_6] : memref<128x8xf32, #tpu.memory_space<vmem>>, vector<128x8xf32>
    %cst_7 = arith.constant dense<0.000000e+00> : vector<64x8xf32>
    %5 = tpu.matmul %2, %4, %cst_7 {dimension_numbers = #tpu.dot_dimension_numbers<[1], [0], [0], [1], [0, 0, 1, 1], [], []>} : vector<64x128xf32>, vector<128x8xf32>, vector<64x8xf32> -> vector<64x8xf32>
    %c0_8 = arith.constant 0 : index
    %c0_9 = arith.constant 0 : index
    %6 = vector.load %arg6[%c0_8, %c0_9] : memref<64x8xf32, #tpu.memory_space<vmem>>, vector<64x8xf32>
    tpu.vector_store %arg6[%c0_8, %c0_9], %5 {strides = array<i32>} : memref<64x8xf32, #tpu.memory_space<vmem>>, vector<64x8xf32>,
    %c0_10 = arith.constant 0 : index
    %c0_11 = arith.constant 0 : index
    %7 = vector.load %arg4[%c0_10, %c0_11] : memref<64x128xf32, #tpu.memory_space<vmem>>, vector<64x128xf32>
    %cst_12 = arith.constant dense<0.000000e+00> : vector<64x128xf32>
    %8 = tpu.matmul %0, %7, %cst_12 {dimension_numbers = #tpu.dot_dimension_numbers<[1], [0], [0], [1], [0, 0, 1, 1], [], []>} : vector<64x64xf32>, vector<64x128xf32>, vector<64x128xf32> -> vector<64x128xf32>
    %c0_13 = arith.constant 0 : index
    %c0_14 = arith.constant 0 : index
    %9 = vector.load %arg7[%c0_13, %c0_14] : memref<64x128xf32, #tpu.memory_space<vmem>>, vector<64x128xf32>
    tpu.vector_store %arg7[%c0_13, %c0_14], %8 {strides = array<i32>} : memref<64x128xf32, #tpu.memory_space<vmem>>, vector<64x128xf32>,
    return
  }
  func.func @transform_0(%arg0: i32) -> (i32, i32) {
    %c0_i32 = arith.constant 0 : i32
    %c0_i32_0 = arith.constant 0 : i32
    return %arg0, %c0_i32 : i32, i32
  }
  func.func @transform_1(%arg0: i32) -> (i32, i32) {
    %c0_i32 = arith.constant 0 : i32
    %c0_i32_0 = arith.constant 0 : i32
    %c0_i32_1 = arith.constant 0 : i32
    return %c0_i32, %c0_i32_0 : i32, i32
  }
  func.func @transform_2(%arg0: i32) -> (i32, i32) {
    %c0_i32 = arith.constant 0 : i32
    %c0_i32_0 = arith.constant 0 : i32
    %c0_i32_1 = arith.constant 0 : i32
    return %c0_i32, %c0_i32_0 : i32, i32
  }
  func.func @transform_3(%arg0: i32) -> (i32, i32) {
    %c0_i32 = arith.constant 0 : i32
    %c0_i32_0 = arith.constant 0 : i32
    %c0_i32_1 = arith.constant 0 : i32
    return %c0_i32, %c0_i32_0 : i32, i32
  }
  func.func @transform_4(%arg0: i32) -> (i32, i32) {
    %c0_i32 = arith.constant 0 : i32
    %c0_i32_0 = arith.constant 0 : i32
    return %arg0, %c0_i32 : i32, i32
  }
  func.func @transform_5(%arg0: i32) -> (i32, i32) {
    %c0_i32 = arith.constant 0 : i32
    %c0_i32_0 = arith.constant 0 : i32
    return %arg0, %c0_i32 : i32, i32
  }
  func.func @transform_6(%arg0: i32) -> (i32, i32) {
    %c0_i32 = arith.constant 0 : i32
    %c0_i32_0 = arith.constant 0 : i32
    return %arg0, %c0_i32 : i32, i32
  }
}

</mosaic_0001>

<llo_original>
// kernel: tpu_custom_call.1
$region0: #{tpu_custom_call.1}
  #allocation0 [shape = 'u32[]', space=smem, size = 0x4, offset = 0x4, fixed_abs, tag = 'smem constant byte address 0x4 - core index']
  #allocation1 [shape = 'u32[144,128]{1,0:T(1,128)}', space=vmem, size = 0x12000, scoped, tag = 'internal scratch']
  %s0 = inlined_call_operand.vmem [shape: f32[128,64], index: 0, kind: input, shape index: {}]
  %s1 = inlined_call_operand.vmem [shape: f32[64,128], index: 1, kind: input, shape index: {}]
  %s2 = inlined_call_operand.vmem [shape: f32[128,8], index: 2, kind: input, shape index: {}]
  %s3 = inlined_call_operand.vmem [shape: f32[64,128], index: 3, kind: input, shape index: {}]
  %s4 = inlined_call_operand.hbm [shape: f32[128,128], index: 4, kind: output, shape index: {0}]
  %s5 = inlined_call_operand.vmem [shape: f32[128,8], index: 5, kind: output, shape index: {1}]
  %s6 = inlined_call_operand.hbm [shape: f32[128,128], index: 6, kind: output, shape index: {2}]
  %7 = xla_tuple %s4, %s5, %s6
  %s8 = sld [smem:[#allocation0]]
  $region65: #{tpu_custom_call.1} parent=0
    _
  %s10 = ssub.s32 1, %s8
  %s11 = scalar_select 0, %s10, %s8
  $region1: #{tpu_custom_call.1} parent=0
    #allocation2 [shape = 'u8[65536]{0}', space=vmem, size = 0x10000, scoped, tag = 'output window, operand 0']
    #allocation3 [shape = 's32[2]{0}', space=sflag, size = 0x8, scoped, tag = 'scoped memory for tpu_custom_call.1']
    #allocation4 [shape = 'u8[65536]{0}', space=vmem, size = 0x10000, scoped, tag = 'output window, operand 2']
    #allocation5 [shape = 's32[2]{0}', space=sflag, size = 0x8, scoped, tag = 'scoped memory for tpu_custom_call.1']
    %12 = vsyncpa [#allocation3], 0
    %s13 = scalar_lea.sflag [#allocation3], 1
    %14 = vsyncpa %s13, 0
    %15 = vsyncpa [#allocation5], 0
    %s16 = scalar_lea.sflag [#allocation5], 1
    %17 = vsyncpa %s16, 0
    loop: start=0, step=1, limit=4
    $region2: #{tpu_custom_call.1} parent=1 // loop_pre_header
      _
    $region3: #{tpu_custom_call.1} parent=1 // loop_header
      %s19 = sphi 0, %s23
      %p20 = scmp.ge.s32.totalorder %s19, 4
      %s29 = sphi 0, %s31
      %s32 = sphi 0, %s29
      %s33 = sphi 0, %s32
      %s49 = sphi 0, %s33
      %s53 = sphi 0, %s53
      %s55 = sphi 0, %s53
      %s56 = sphi 0, %s55
      %s70 = sphi 0, %s56
      %s74 = sphi 0, %s74
      %s76 = sphi 0, %s74
      %s77 = sphi 0, %s76
      %s91 = sphi 0, %s77
      %s95 = sphi 0, %s95
      %s97 = sphi 0, %s95
      %s98 = sphi 0, %s97
      %s112 = sphi 0, %s98
      %s118 = sphi 0, %s120
      %s121 = sphi 0, %s118
      %s122 = sphi 0, %s121
      %s138 = sphi 0, %s122
      %s144 = sphi 0, %s146
      %s147 = sphi 0, %s144
      %s148 = sphi 0, %s147
      %s164 = sphi 0, %s148
      %s170 = sphi 0, %s172
      %s173 = sphi 0, %s170
      %s174 = sphi 0, %s173
      %s190 = sphi 0, %s174
    $region4: #{tpu_custom_call.1} parent=1 // loop_header_branch
      %22 = sbr.rel (%p20) target = $region8
    $region5: #{tpu_custom_call.1} parent=1 // loop_body
      %s24 = ssub.s32 %s19, 1
      %s25 = ssub.s32 %s19, 2
      %s26 = sadd.s32 %s19, 1
      %s27 = ssub.s32 %s19, %s26
      %p28 = scmp.eq.s32.totalorder %s27, 0
      %s30 = sadd.s32 %s29, 1
      %s31 = scalar_select %p28, %s29, %s30
      %p34 = pneg %p28
      %p35 = scmp.eq.s32.totalorder %s19, 1
      %p36 = por %p34, %p35
      %p37 = scmp.ne.s32.totalorder %s29, %s32
      %p38 = scmp.eq.s32.totalorder %s19, 0
      %p39 = por %p37, %p38
      %p40 = scmp.ne.s32.totalorder %s29, %s32
      %p41 = scmp.eq.s32.totalorder %s24, 1
      %p42 = por %p40, %p41
      %p43 = scmp.ne.s32.totalorder %s32, %s33
      %p44 = scmp.eq.s32.totalorder %s24, 0
      %p45 = por %p43, %p44
      %p46 = scmp.ne.s32.totalorder %s32, %s33
      %p47 = scmp.eq.s32.totalorder %s25, 1
      %p48 = por %p46, %p47
      %p50 = scmp.ne.s32.totalorder %s33, %s49
      %p51 = scmp.eq.s32.totalorder %s25, 0
      %p52 = por %p50, %p51
      %s54 = sadd.s32 %s53, 1
      %p57 = scmp.eq.s32.totalorder %s19, 1
      %p58 = scmp.ne.s32.totalorder %s53, %s55
      %p59 = scmp.eq.s32.totalorder %s19, 0
      %p60 = por %p58, %p59
      %p61 = scmp.ne.s32.totalorder %s53, %s55
      %p62 = scmp.eq.s32.totalorder %s24, 1
      %p63 = por %p61, %p62
      %p64 = scmp.ne.s32.totalorder %s55, %s56
      %p65 = scmp.eq.s32.totalorder %s24, 0
      %p66 = por %p64, %p65
      %p67 = scmp.ne.s32.totalorder %s55, %s56
      %p68 = scmp.eq.s32.totalorder %s25, 1
      %p69 = por %p67, %p68
      %p71 = scmp.ne.s32.totalorder %s56, %s70
      %p72 = scmp.eq.s32.totalorder %s25, 0
      %p73 = por %p71, %p72
      %s75 = sadd.s32 %s74, 1
      %p78 = scmp.eq.s32.totalorder %s19, 1
      %p79 = scmp.ne.s32.totalorder %s74, %s76
      %p80 = scmp.eq.s32.totalorder %s19, 0
      %p81 = por %p79, %p80
      %p82 = scmp.ne.s32.totalorder %s74, %s76
      %p83 = scmp.eq.s32.totalorder %s24, 1
      %p84 = por %p82, %p83
      %p85 = scmp.ne.s32.totalorder %s76, %s77
      %p86 = scmp.eq.s32.totalorder %s24, 0
      %p87 = por %p85, %p86
      %p88 = scmp.ne.s32.totalorder %s76, %s77
      %p89 = scmp.eq.s32.totalorder %s25, 1
      %p90 = por %p88, %p89
      %p92 = scmp.ne.s32.totalorder %s77, %s91
      %p93 = scmp.eq.s32.totalorder %s25, 0
      %p94 = por %p92, %p93
      %s96 = sadd.s32 %s95, 1
      %p99 = scmp.eq.s32.totalorder %s19, 1
      %p100 = scmp.ne.s32.totalorder %s95, %s97
      %p101 = scmp.eq.s32.totalorder %s19, 0
      %p102 = por %p100, %p101
      %p103 = scmp.ne.s32.totalorder %s95, %s97
      %p104 = scmp.eq.s32.totalorder %s24, 1
      %p105 = por %p103, %p104
      %p106 = scmp.ne.s32.totalorder %s97, %s98
      %p107 = scmp.eq.s32.totalorder %s24, 0
      %p108 = por %p106, %p107
      %p109 = scmp.ne.s32.totalorder %s97, %s98
      %p110 = scmp.eq.s32.totalorder %s25, 1
      %p111 = por %p109, %p110
      %p113 = scmp.ne.s32.totalorder %s98, %s112
      %p114 = scmp.eq.s32.totalorder %s25, 0
      %p115 = por %p113, %p114
      %s116 = ssub.s32 %s19, %s26
      %p117 = scmp.eq.s32.totalorder %s116, 0
      %s119 = sadd.s32 %s118, 1
      %s120 = scalar_select %p117, %s118, %s119
      %p123 = pneg %p117
      %p124 = scmp.eq.s32.totalorder %s19, 1
      %p125 = por %p123, %p124
      %p126 = scmp.ne.s32.totalorder %s118, %s121
      %p127 = scmp.eq.s32.totalorder %s19, 0
      %p128 = por %p126, %p127
      %p129 = scmp.ne.s32.totalorder %s118, %s121
      %p130 = scmp.eq.s32.totalorder %s24, 1
      %p131 = por %p129, %p130
      %p132 = scmp.ne.s32.totalorder %s121, %s122
      %p133 = scmp.eq.s32.totalorder %s24, 0
      %p134 = por %p132, %p133
      %p135 = scmp.ne.s32.totalorder %s121, %s122
      %p136 = scmp.eq.s32.totalorder %s25, 1
      %p137 = por %p135, %p136
      %p139 = scmp.ne.s32.totalorder %s122, %s138
      %p140 = scmp.eq.s32.totalorder %s25, 0
      %p141 = por %p139, %p140
      %s142 = ssub.s32 %s19, %s26
      %p143 = scmp.eq.s32.totalorder %s142, 0
      %s145 = sadd.s32 %s144, 1
      %s146 = scalar_select %p143, %s144, %s145
      %p149 = pneg %p143
      %p150 = scmp.eq.s32.totalorder %s19, 1
      %p151 = por %p149, %p150
      %p152 = scmp.ne.s32.totalorder %s144, %s147
      %p153 = scmp.eq.s32.totalorder %s19, 0
      %p154 = por %p152, %p153
      %p155 = scmp.ne.s32.totalorder %s144, %s147
      %p156 = scmp.eq.s32.totalorder %s24, 1
      %p157 = por %p155, %p156
      %p158 = scmp.ne.s32.totalorder %s147, %s148
      %p159 = scmp.eq.s32.totalorder %s24, 0
      %p160 = por %p158, %p159
      %p161 = scmp.ne.s32.totalorder %s147, %s148
      %p162 = scmp.eq.s32.totalorder %s25, 1
      %p163 = por %p161, %p162
      %p165 = scmp.ne.s32.totalorder %s148, %s164
      %p166 = scmp.eq.s32.totalorder %s25, 0
      %p167 = por %p165, %p166
      %s168 = ssub.s32 %s19, %s26
      %p169 = scmp.eq.s32.totalorder %s168, 0
      %s171 = sadd.s32 %s170, 1
      %s172 = scalar_select %p169, %s170, %s171
      %p175 = pneg %p169
      %p176 = scmp.eq.s32.totalorder %s19, 1
      %p177 = por %p175, %p176
      %p178 = scmp.ne.s32.totalorder %s170, %s173
      %p179 = scmp.eq.s32.totalorder %s19, 0
      %p180 = por %p178, %p179
      %p181 = scmp.ne.s32.totalorder %s170, %s173
      %p182 = scmp.eq.s32.totalorder %s24, 1
      %p183 = por %p181, %p182
      %p184 = scmp.ne.s32.totalorder %s173, %s174
      %p185 = scmp.eq.s32.totalorder %s24, 0
      %p186 = por %p184, %p185
      %p187 = scmp.ne.s32.totalorder %s173, %s174
      %p188 = scmp.eq.s32.totalorder %s25, 1
      %p189 = por %p187, %p188
      %p191 = scmp.ne.s32.totalorder %s174, %s190
      %p192 = scmp.eq.s32.totalorder %s25, 0
      %p193 = por %p191, %p192
      %p194 = scmp.le.s32.totalorder 1, %s19
      %p195 = scmp.lt.s32.totalorder %s19, 3
      %p196 = pnand %p194, %p195
      %p197 = pneg %p196
      // Predicated region
      $region9: #{tpu_custom_call.1} parent=5 // pred_check
        _
      $region10: #{tpu_custom_call.1} parent=5 // pred_check_branch
        %199 = sbr.rel (%p196) target = $region12
      $region11: #{tpu_custom_call.1} parent=5 // pred_region
        %s200 = ssub.s32 %s19, 1
        // Predicated region
        $region13: #{tpu_custom_call.1} parent=11 // pred_check
          %p201 = pneg %p66
        $region14: #{tpu_custom_call.1} parent=11 // pred_check_branch
          %203 = sbr.rel (%p201) target = $region16
        $region15: #{tpu_custom_call.1} parent=11 // pred_region
          _
        $region16: #{tpu_custom_call.1} parent=11 // pred_fallthru
          _
        // Predicated region
        $region17: #{tpu_custom_call.1} parent=11 // pred_check
          %p204 = pneg %p87
        $region18: #{tpu_custom_call.1} parent=11 // pred_check_branch
          %206 = sbr.rel (%p204) target = $region20
        $region19: #{tpu_custom_call.1} parent=11 // pred_region
          _
        $region20: #{tpu_custom_call.1} parent=11 // pred_fallthru
          _
        // Predicated region
        $region21: #{tpu_custom_call.1} parent=11 // pred_check
          %p207 = pneg %p108
        $region22: #{tpu_custom_call.1} parent=11 // pred_check_branch
          %209 = sbr.rel (%p207) target = $region24
        $region23: #{tpu_custom_call.1} parent=11 // pred_region
          _
        $region24: #{tpu_custom_call.1} parent=11 // pred_fallthru
          _
      $region12: #{tpu_custom_call.1} parent=5 // pred_fallthru
        _
      %p210 = scmp.lt.s32.totalorder %s19, 2
      // Predicated region
      $region25: #{tpu_custom_call.1} parent=5 // pred_check
        %p211 = pneg %p210
      $region26: #{tpu_custom_call.1} parent=5 // pred_check_branch
        %213 = sbr.rel (%p211) target = $region28
      $region27: #{tpu_custom_call.1} parent=5 // pred_region
        // Predicated region
        $region29: #{tpu_custom_call.1} parent=27 // pred_check
          %p214 = pneg %p39
        $region30: #{tpu_custom_call.1} parent=27 // pred_check_branch
          %216 = sbr.rel (%p214) target = $region32
        $region31: #{tpu_custom_call.1} parent=27 // pred_region
          %s217 = smul.u32 8, %s19
          %p218 = scmp.lt.s32.totalorder %s217, 15
          %s219 = scalar_select %p218, %s217, 15
          %s220 = smul.addr %s219, 8
          %s221 = scalar_lea.vmem %s0, %s220
          %s222 = smul.u32 8, %s19
        $region32: #{tpu_custom_call.1} parent=27 // pred_fallthru
          _
      $region28: #{tpu_custom_call.1} parent=5 // pred_fallthru
        _
      %p223 = scmp.le.s32.totalorder 1, %s19
      %p224 = scmp.lt.s32.totalorder %s19, 3
      %p225 = pnand %p223, %p224
      %p226 = pneg %p225
      // Predicated region
      $region33: #{tpu_custom_call.1} parent=5 // pred_check
        _
      $region34: #{tpu_custom_call.1} parent=5 // pred_check_branch
        %228 = sbr.rel (%p225) target = $region36
      $region35: #{tpu_custom_call.1} parent=5 // pred_region
        %s229 = ssub.s32 %s19, 1
        %s230 = smul.u32 8, %s24
        %p231 = scmp.lt.s32.totalorder %s230, 15
        %s232 = scalar_select %p231, %s230, 15
        %s233 = smul.addr %s232, 8
        %s234 = scalar_lea.vmem %s0, %s233
        %p235 = pneg %p45
        %p236 = pneg %p42
        %p237 = pneg %p66
        %p238 = pneg %p63
        %p239 = pneg %p87
        %p240 = pneg %p84
        %p241 = pneg %p108
        %p242 = pneg %p105
        %p243 = pneg %p134
        %p244 = pneg %p131
        %s245 = sand.u32 %s121, 1
        %s246 = scalar_lea.sflag [#allocation3], %s245
        %s247 = sand.u32 %s121, 1
        %s248 = smul.addr %s247, 64
        %s249 = scalar_lea.vmem [#allocation2], %s248
        %p250 = pneg %p160
        %p251 = pneg %p157
        %s252 = smul.u32 8, %s24
        %p253 = scmp.lt.s32.totalorder %s252, 15
        %s254 = scalar_select %p253, %s252, 15
        %s255 = smul.addr %s254, 8
        %s256 = scalar_lea.vmem %s5, %s255
        %p257 = pneg %p186
        %p258 = pneg %p183
        %s259 = sand.u32 %s173, 1
        %s260 = scalar_lea.sflag [#allocation5], %s259
        %s261 = sand.u32 %s173, 1
        %s262 = smul.addr %s261, 64
        %s263 = scalar_lea.vmem [#allocation4], %s262
        %s264 = smul.u32 8, %s24
        %p265 = scmp.lt.s32.totalorder %s264, 15
        %s266 = scalar_select %p265, %s264, 15
        %s267 = smul.addr %s266, 8
        %s268 = scalar_lea.vmem %s0, %s267
        %s269 = smul.u32 8, %s24
        %s270 = smul.u32 8, %s24
        %s271 = smul.u32 8, %s24
        %p272 = scmp.lt.s32.totalorder %s271, 15
        %s273 = scalar_select %p272, %s271, 15
        %s274 = smul.addr %s273, 8
        %s275 = scalar_lea.vmem %s5, %s274
        %s276 = smul.u32 8, %s24
        %s277 = smul.u32 8, %s24
        %v278 = vld [vmem:[%s268] sm:$0xff]
        %v279 = vld [vmem:[%s268 + $0x8] sm:$0xff]
        %v280 = vld [vmem:[%s268 + $0x10] sm:$0xff]
        %v281 = vld [vmem:[%s268 + $0x18] sm:$0xff]
        %v282 = vld [vmem:[%s268 + $0x20] sm:$0xff]
        %v283 = vld [vmem:[%s268 + $0x28] sm:$0xff]
        %v284 = vld [vmem:[%s268 + $0x30] sm:$0xff]
        %v285 = vld [vmem:[%s268 + $0x38] sm:$0xff]
        %v286 = vld [vmem:[%s1] sm:$0xff]
        %v287 = vld [vmem:[%s1 + $0x8] sm:$0xff]
        %v288 = vld [vmem:[%s1 + $0x10] sm:$0xff]
        %v289 = vld [vmem:[%s1 + $0x18] sm:$0xff]
        %v290 = vld [vmem:[%s1 + $0x20] sm:$0xff]
        %v291 = vld [vmem:[%s1 + $0x28] sm:$0xff]
        %v292 = vld [vmem:[%s1 + $0x30] sm:$0xff]
        %v293 = vld [vmem:[%s1 + $0x38] sm:$0xff]
        %vm294 = vcmask 523264
        %v296 = vsel %vm294, %v278, 0
        %v299 = vsel %vm294, %v279, 0
        %v302 = vsel %vm294, %v280, 0
        %v305 = vsel %vm294, %v281, 0
        %v308 = vsel %vm294, %v282, 0
        %v311 = vsel %vm294, %v283, 0
        %v314 = vsel %vm294, %v284, 0
        %v317 = vsel %vm294, %v285, 0
        %319 = vmatprep.subr.mxu0 0.0
        %320 = vmatpush1.msra.mxu0 %v286
        %321 = vmatprep.subr.mxu0 0.0
        %322 = vmatpush1.msra.mxu0 %v287
        %323 = vmatprep.subr.mxu0 0.0
        %324 = vmatpush1.msra.mxu0 %v288
        %325 = vmatprep.subr.mxu0 0.0
        %326 = vmatpush1.msra.mxu0 %v289
        %327 = vmatprep.subr.mxu0 0.0
        %328 = vmatpush1.msra.mxu0 %v290
        %329 = vmatprep.subr.mxu0 0.0
        %330 = vmatpush1.msra.mxu0 %v291
        %331 = vmatprep.subr.mxu0 0.0
        %332 = vmatpush1.msra.mxu0 %v292
        %333 = vmatprep.subr.mxu0 0.0
        %334 = vmatpush1.msra.mxu0 %v293
        %335 = vmatprep.subr.mxu0 0.0
        %336 = vmatpush1.msra.mxu0 0.0
        %337 = vmatprep.subr.mxu0 0.0
        %338 = vmatpush1.msra.mxu0 0.0
        %339 = vmatprep.subr.mxu0 0.0
        %340 = vmatpush1.msra.mxu0 0.0
        %341 = vmatprep.subr.mxu0 0.0
        %342 = vmatpush1.msra.mxu0 0.0
        %343 = vmatprep.subr.mxu0 0.0
        %344 = vmatpush1.msra.mxu0 0.0
        %345 = vmatprep.subr.mxu0 0.0
        %346 = vmatpush1.msra.mxu0 0.0
        %347 = vmatprep.subr.mxu0 0.0
        %348 = vmatpush1.msra.mxu0 0.0
        %349 = vmatprep.subr.mxu0 0.0
        %350 = vmatpush1.msra.mxu0 0.0
        %351 = vmatprep.subr.mxu0 0.0
        %352 = vmatpush1.msra.mxu0 0.0
        %353 = vmatprep.subr.mxu0 0.0
        %354 = vmatpush1.msra.mxu0 0.0
        %355 = vmatprep.subr.mxu0 0.0
        %356 = vmatpush1.msra.mxu0 0.0
        %357 = vmatprep.subr.mxu0 0.0
        %358 = vmatpush1.msra.mxu0 0.0
        %359 = vmatprep.subr.mxu0 0.0
        %360 = vmatpush1.msra.mxu0 0.0
        %361 = vmatprep.subr.mxu0 0.0
        %362 = vmatpush1.msra.mxu0 0.0
        %363 = vmatprep.subr.mxu0 0.0
        %364 = vmatpush1.msra.mxu0 0.0
        %365 = vmatprep.subr.mxu0 0.0
        %366 = vmatpush1.msra.mxu0 0.0
        %367 = vmatprep.subr.mxu0 0.0
        %368 = vmatpush1.msra.mxu0 0.0
        %369 = vmatprep.subr.mxu0 0.0
        %370 = vmatpush1.msra.mxu0 0.0
        %371 = vmatprep.subr.mxu0 0.0
        %372 = vmatpush1.msra.mxu0 0.0
        %373 = vmatprep.subr.mxu0 0.0
        %374 = vmatpush1.msra.mxu0 0.0
        %375 = vmatprep.subr.mxu0 0.0
        %376 = vmatpush1.msra.mxu0 0.0
        %377 = vmatprep.subr.mxu0 0.0
        %378 = vmatpush1.msra.mxu0 0.0
        %379 = vmatprep.subr.mxu0 0.0
        %380 = vmatpush1.msra.mxu0 0.0
        %381 = vmatprep.subr.mxu0 0.0
        %382 = vmatpush1.msra.mxu0 0.0
        %383 = vmatprep.mubr.f32.mxu0 0.0
        %384 = vmatmul.mubr.f32.gmra.mrb[0].mxu0 %v296
        %v385 = vpop.f32.mrb[0].mxu0
        %v386 = vadd.f32 0.0, %v385
        %v387 = vpop.f32.mrb[0].mxu0
        %388 = vmatprep.mubr.f32.mxu0 0.0
        %389 = vmatmul.mubr.f32.gmra.mrb[0].mxu0 %v299
        %v390 = vpop.f32.mrb[0].mxu0
        %v391 = vadd.f32 0.0, %v390
        %v392 = vpop.f32.mrb[0].mxu0
        %393 = vmatprep.mubr.f32.mxu0 0.0
        %394 = vmatmul.mubr.f32.gmra.mrb[0].mxu0 %v302
        %v395 = vpop.f32.mrb[0].mxu0
        %v396 = vadd.f32 0.0, %v395
        %v397 = vpop.f32.mrb[0].mxu0
        %398 = vmatprep.mubr.f32.mxu0 0.0
        %399 = vmatmul.mubr.f32.gmra.mrb[0].mxu0 %v305
        %v400 = vpop.f32.mrb[0].mxu0
        %v401 = vadd.f32 0.0, %v400
        %v402 = vpop.f32.mrb[0].mxu0
        %403 = vmatprep.mubr.f32.mxu0 0.0
        %404 = vmatmul.mubr.f32.gmra.mrb[0].mxu0 %v308
        %v405 = vpop.f32.mrb[0].mxu0
        %v406 = vadd.f32 0.0, %v405
        %v407 = vpop.f32.mrb[0].mxu0
        %408 = vmatprep.mubr.f32.mxu0 0.0
        %409 = vmatmul.mubr.f32.gmra.mrb[0].mxu0 %v311
        %v410 = vpop.f32.mrb[0].mxu0
        %v411 = vadd.f32 0.0, %v410
        %v412 = vpop.f32.mrb[0].mxu0
        %413 = vmatprep.mubr.f32.mxu0 0.0
        %414 = vmatmul.mubr.f32.gmra.mrb[0].mxu0 %v314
        %v415 = vpop.f32.mrb[0].mxu0
        %v416 = vadd.f32 0.0, %v415
        %v417 = vpop.f32.mrb[0].mxu0
        %418 = vmatprep.mubr.f32.mxu0 0.0
        %419 = vmatmul.mubr.f32.gmra.mrb[0].mxu0 %v317
        %v420 = vpop.f32.mrb[0].mxu0
        %v421 = vadd.f32 0.0, %v420
        %v422 = vpop.f32.mrb[0].mxu0
        %423 = vdwg.mxu0
        %424 = vst [vmem:[%s249] sm:$0xff] %v386
        %425 = vst [vmem:[%s249 + $0x8] sm:$0xff] %v391
        %426 = vst [vmem:[%s249 + $0x10] sm:$0xff] %v396
        %427 = vst [vmem:[%s249 + $0x18] sm:$0xff] %v401
        %428 = vst [vmem:[%s249 + $0x20] sm:$0xff] %v406
        %429 = vst [vmem:[%s249 + $0x28] sm:$0xff] %v411
        %430 = vst [vmem:[%s249 + $0x30] sm:$0xff] %v416
        %431 = vst [vmem:[%s249 + $0x38] sm:$0xff] %v421
        %v432 = vld [vmem:[%s2] sm:$0xff]
        %v433 = vld [vmem:[%s2 + $0x8] sm:$0xff]
        %v434 = vld [vmem:[%s2 + $0x10] sm:$0xff]
        %v435 = vld [vmem:[%s2 + $0x18] sm:$0xff]
        %v436 = vld [vmem:[%s2 + $0x20] sm:$0xff]
        %v437 = vld [vmem:[%s2 + $0x28] sm:$0xff]
        %v438 = vld [vmem:[%s2 + $0x30] sm:$0xff]
        %v439 = vld [vmem:[%s2 + $0x38] sm:$0xff]
        %v440 = vld [vmem:[%s2 + $0x40] sm:$0xff]
        %v441 = vld [vmem:[%s2 + $0x48] sm:$0xff]
        %v442 = vld [vmem:[%s2 + $0x50] sm:$0xff]
        %v443 = vld [vmem:[%s2 + $0x58] sm:$0xff]
        %v444 = vld [vmem:[%s2 + $0x60] sm:$0xff]
        %v445 = vld [vmem:[%s2 + $0x68] sm:$0xff]
        %v446 = vld [vmem:[%s2 + $0x70] sm:$0xff]
        %v447 = vld [vmem:[%s2 + $0x78] sm:$0xff]
        %448 = vmatprep.subr.mxu0 0.0
        %449 = vmatpush1.msra.mxu0 %v432
        %450 = vmatprep.subr.mxu0 0.0
        %451 = vmatpush1.msra.mxu0 %v433
        %452 = vmatprep.subr.mxu0 0.0
        %453 = vmatpush1.msra.mxu0 %v434
        %454 = vmatprep.subr.mxu0 0.0
        %455 = vmatpush1.msra.mxu0 %v435
        %456 = vmatprep.subr.mxu0 0.0
        %457 = vmatpush1.msra.mxu0 %v436
        %458 = vmatprep.subr.mxu0 0.0
        %459 = vmatpush1.msra.mxu0 %v437
        %460 = vmatprep.subr.mxu0 0.0
        %461 = vmatpush1.msra.mxu0 %v438
        %462 = vmatprep.subr.mxu0 0.0
        %463 = vmatpush1.msra.mxu0 %v439
        %464 = vmatprep.subr.mxu0 0.0
        %465 = vmatpush1.msra.mxu0 %v440
        %466 = vmatprep.subr.mxu0 0.0
        %467 = vmatpush1.msra.mxu0 %v441
        %468 = vmatprep.subr.mxu0 0.0
        %469 = vmatpush1.msra.mxu0 %v442
        %470 = vmatprep.subr.mxu0 0.0
        %471 = vmatpush1.msra.mxu0 %v443
        %472 = vmatprep.subr.mxu0 0.0
        %473 = vmatpush1.msra.mxu0 %v444
        %474 = vmatprep.subr.mxu0 0.0
        %475 = vmatpush1.msra.mxu0 %v445
        %476 = vmatprep.subr.mxu0 0.0
        %477 = vmatpush1.msra.mxu0 %v446
        %478 = vmatprep.subr.mxu0 0.0
        %479 = vmatpush1.msra.mxu0 %v447
        %480 = vmatprep.subr.mxu0 0.0
        %481 = vmatpush1.msra.mxu0 0.0
        %482 = vmatprep.subr.mxu0 0.0
        %483 = vmatpush1.msra.mxu0 0.0
        %484 = vmatprep.subr.mxu0 0.0
        %485 = vmatpush1.msra.mxu0 0.0
        %486 = vmatprep.subr.mxu0 0.0
        %487 = vmatpush1.msra.mxu0 0.0
        %488 = vmatprep.subr.mxu0 0.0
        %489 = vmatpush1.msra.mxu0 0.0
        %490 = vmatprep.subr.mxu0 0.0
        %491 = vmatpush1.msra.mxu0 0.0
        %492 = vmatprep.subr.mxu0 0.0
        %493 = vmatpush1.msra.mxu0 0.0
        %494 = vmatprep.subr.mxu0 0.0
        %495 = vmatpush1.msra.mxu0 0.0
        %496 = vmatprep.subr.mxu0 0.0
        %497 = vmatpush1.msra.mxu0 0.0
        %498 = vmatprep.subr.mxu0 0.0
        %499 = vmatpush1.msra.mxu0 0.0
        %500 = vmatprep.subr.mxu0 0.0
        %501 = vmatpush1.msra.mxu0 0.0
        %502 = vmatprep.subr.mxu0 0.0
        %503 = vmatpush1.msra.mxu0 0.0
        %504 = vmatprep.subr.mxu0 0.0
        %505 = vmatpush1.msra.mxu0 0.0
        %506 = vmatprep.subr.mxu0 0.0
        %507 = vmatpush1.msra.mxu0 0.0
        %508 = vmatprep.subr.mxu0 0.0
        %509 = vmatpush1.msra.mxu0 0.0
        %510 = vmatprep.subr.mxu0 0.0
        %511 = vmatpush1.msra.mxu0 0.0
        %512 = vmatprep.mubr.f32.mxu0 0.0
        %513 = vmatmul.mubr.f32.gmra.mrb[0].mxu0 %v386
        %v514 = vpop.f32.mrb[0].mxu0
        %v515 = vadd.f32 0.0, %v514
        %v516 = vpop.f32.mrb[0].mxu0
        %517 = vmatprep.mubr.f32.mxu0 0.0
        %518 = vmatmul.mubr.f32.gmra.mrb[0].mxu0 %v391
        %v519 = vpop.f32.mrb[0].mxu0
        %v520 = vadd.f32 0.0, %v519
        %v521 = vpop.f32.mrb[0].mxu0
        %522 = vmatprep.mubr.f32.mxu0 0.0
        %523 = vmatmul.mubr.f32.gmra.mrb[0].mxu0 %v396
        %v524 = vpop.f32.mrb[0].mxu0
        %v525 = vadd.f32 0.0, %v524
        %v526 = vpop.f32.mrb[0].mxu0
        %527 = vmatprep.mubr.f32.mxu0 0.0
        %528 = vmatmul.mubr.f32.gmra.mrb[0].mxu0 %v401
        %v529 = vpop.f32.mrb[0].mxu0
        %v530 = vadd.f32 0.0, %v529
        %v531 = vpop.f32.mrb[0].mxu0
        %532 = vmatprep.mubr.f32.mxu0 0.0
        %533 = vmatmul.mubr.f32.gmra.mrb[0].mxu0 %v406
        %v534 = vpop.f32.mrb[0].mxu0
        %v535 = vadd.f32 0.0, %v534
        %v536 = vpop.f32.mrb[0].mxu0
        %537 = vmatprep.mubr.f32.mxu0 0.0
        %538 = vmatmul.mubr.f32.gmra.mrb[0].mxu0 %v411
        %v539 = vpop.f32.mrb[0].mxu0
        %v540 = vadd.f32 0.0, %v539
        %v541 = vpop.f32.mrb[0].mxu0
        %542 = vmatprep.mubr.f32.mxu0 0.0
        %543 = vmatmul.mubr.f32.gmra.mrb[0].mxu0 %v416
        %v544 = vpop.f32.mrb[0].mxu0
        %v545 = vadd.f32 0.0, %v544
        %v546 = vpop.f32.mrb[0].mxu0
        %547 = vmatprep.mubr.f32.mxu0 0.0
        %548 = vmatmul.mubr.f32.gmra.mrb[0].mxu0 %v421
        %v549 = vpop.f32.mrb[0].mxu0
        %v550 = vadd.f32 0.0, %v549
        %v551 = vpop.f32.mrb[0].mxu0
        %552 = vdwg.mxu0
        %vm553 = vcmask 64512
        %554 = vst.msk [vmem:[%s275] sm:$0xff] %vm553, %v515
        %555 = vst.msk [vmem:[%s275 + $0x8] sm:$0xff] %vm553, %v520
        %556 = vst.msk [vmem:[%s275 + $0x10] sm:$0xff] %vm553, %v525
        %557 = vst.msk [vmem:[%s275 + $0x18] sm:$0xff] %vm553, %v530
        %558 = vst.msk [vmem:[%s275 + $0x20] sm:$0xff] %vm553, %v535
        %559 = vst.msk [vmem:[%s275 + $0x28] sm:$0xff] %vm553, %v540
        %560 = vst.msk [vmem:[%s275 + $0x30] sm:$0xff] %vm553, %v545
        %561 = vst.msk [vmem:[%s275 + $0x38] sm:$0xff] %vm553, %v550
        %v562 = vld [vmem:[%s3] sm:$0xff]
        %v563 = vld [vmem:[%s3 + $0x8] sm:$0xff]
        %v564 = vld [vmem:[%s3 + $0x10] sm:$0xff]
        %v565 = vld [vmem:[%s3 + $0x18] sm:$0xff]
        %v566 = vld [vmem:[%s3 + $0x20] sm:$0xff]
        %v567 = vld [vmem:[%s3 + $0x28] sm:$0xff]
        %v568 = vld [vmem:[%s3 + $0x30] sm:$0xff]
        %v569 = vld [vmem:[%s3 + $0x38] sm:$0xff]
        %570 = vmatprep.subr.mxu0 0.0
        %571 = vmatpush1.msra.mxu0 %v562
        %572 = vmatprep.subr.mxu0 0.0
        %573 = vmatpush1.msra.mxu0 %v563
        %574 = vmatprep.subr.mxu0 0.0
        %575 = vmatpush1.msra.mxu0 %v564
        %576 = vmatprep.subr.mxu0 0.0
        %577 = vmatpush1.msra.mxu0 %v565
        %578 = vmatprep.subr.mxu0 0.0
        %579 = vmatpush1.msra.mxu0 %v566
        %580 = vmatprep.subr.mxu0 0.0
        %581 = vmatpush1.msra.mxu0 %v567
        %582 = vmatprep.subr.mxu0 0.0
        %583 = vmatpush1.msra.mxu0 %v568
        %584 = vmatprep.subr.mxu0 0.0
        %585 = vmatpush1.msra.mxu0 %v569
        %586 = vmatprep.subr.mxu0 0.0
        %587 = vmatpush1.msra.mxu0 0.0
        %588 = vmatprep.subr.mxu0 0.0
        %589 = vmatpush1.msra.mxu0 0.0
        %590 = vmatprep.subr.mxu0 0.0
        %591 = vmatpush1.msra.mxu0 0.0
        %592 = vmatprep.subr.mxu0 0.0
        %593 = vmatpush1.msra.mxu0 0.0
        %594 = vmatprep.subr.mxu0 0.0
        %595 = vmatpush1.msra.mxu0 0.0
        %596 = vmatprep.subr.mxu0 0.0
        %597 = vmatpush1.msra.mxu0 0.0
        %598 = vmatprep.subr.mxu0 0.0
        %599 = vmatpush1.msra.mxu0 0.0
        %600 = vmatprep.subr.mxu0 0.0
        %601 = vmatpush1.msra.mxu0 0.0
        %602 = vmatprep.subr.mxu0 0.0
        %603 = vmatpush1.msra.mxu0 0.0
        %604 = vmatprep.subr.mxu0 0.0
        %605 = vmatpush1.msra.mxu0 0.0
        %606 = vmatprep.subr.mxu0 0.0
        %607 = vmatpush1.msra.mxu0 0.0
        %608 = vmatprep.subr.mxu0 0.0
        %609 = vmatpush1.msra.mxu0 0.0
        %610 = vmatprep.subr.mxu0 0.0
        %611 = vmatpush1.msra.mxu0 0.0
        %612 = vmatprep.subr.mxu0 0.0
        %613 = vmatpush1.msra.mxu0 0.0
        %614 = vmatprep.subr.mxu0 0.0
        %615 = vmatpush1.msra.mxu0 0.0
        %616 = vmatprep.subr.mxu0 0.0
        %617 = vmatpush1.msra.mxu0 0.0
        %618 = vmatprep.subr.mxu0 0.0
        %619 = vmatpush1.msra.mxu0 0.0
        %620 = vmatprep.subr.mxu0 0.0
        %621 = vmatpush1.msra.mxu0 0.0
        %622 = vmatprep.subr.mxu0 0.0
        %623 = vmatpush1.msra.mxu0 0.0
        %624 = vmatprep.subr.mxu0 0.0
        %625 = vmatpush1.msra.mxu0 0.0
        %626 = vmatprep.subr.mxu0 0.0
        %627 = vmatpush1.msra.mxu0 0.0
        %628 = vmatprep.subr.mxu0 0.0
        %629 = vmatpush1.msra.mxu0 0.0
        %630 = vmatprep.subr.mxu0 0.0
        %631 = vmatpush1.msra.mxu0 0.0
        %632 = vmatprep.subr.mxu0 0.0
        %633 = vmatpush1.msra.mxu0 0.0
        %634 = vmatprep.mubr.f32.mxu0 0.0
        %635 = vmatmul.mubr.f32.gmra.mrb[0].mxu0 %v296
        %v636 = vpop.f32.mrb[0].mxu0
        %v637 = vadd.f32 0.0, %v636
        %v638 = vpop.f32.mrb[0].mxu0
        %639 = vmatprep.mubr.f32.mxu0 0.0
        %640 = vmatmul.mubr.f32.gmra.mrb[0].mxu0 %v299
        %v641 = vpop.f32.mrb[0].mxu0
        %v642 = vadd.f32 0.0, %v641
        %v643 = vpop.f32.mrb[0].mxu0
        %644 = vmatprep.mubr.f32.mxu0 0.0
        %645 = vmatmul.mubr.f32.gmra.mrb[0].mxu0 %v302
        %v646 = vpop.f32.mrb[0].mxu0
        %v647 = vadd.f32 0.0, %v646
        %v648 = vpop.f32.mrb[0].mxu0
        %649 = vmatprep.mubr.f32.mxu0 0.0
        %650 = vmatmul.mubr.f32.gmra.mrb[0].mxu0 %v305
        %v651 = vpop.f32.mrb[0].mxu0
        %v652 = vadd.f32 0.0, %v651
        %v653 = vpop.f32.mrb[0].mxu0
        %654 = vmatprep.mubr.f32.mxu0 0.0
        %655 = vmatmul.mubr.f32.gmra.mrb[0].mxu0 %v308
        %v656 = vpop.f32.mrb[0].mxu0
        %v657 = vadd.f32 0.0, %v656
        %v658 = vpop.f32.mrb[0].mxu0
        %659 = vmatprep.mubr.f32.mxu0 0.0
        %660 = vmatmul.mubr.f32.gmra.mrb[0].mxu0 %v311
        %v661 = vpop.f32.mrb[0].mxu0
        %v662 = vadd.f32 0.0, %v661
        %v663 = vpop.f32.mrb[0].mxu0
        %664 = vmatprep.mubr.f32.mxu0 0.0
        %665 = vmatmul.mubr.f32.gmra.mrb[0].mxu0 %v314
        %v666 = vpop.f32.mrb[0].mxu0
        %v667 = vadd.f32 0.0, %v666
        %v668 = vpop.f32.mrb[0].mxu0
        %669 = vmatprep.mubr.f32.mxu0 0.0
        %670 = vmatmul.mubr.f32.gmra.mrb[0].mxu0 %v317
        %v671 = vpop.f32.mrb[0].mxu0
        %v672 = vadd.f32 0.0, %v671
        %v673 = vpop.f32.mrb[0].mxu0
        %674 = vdwg.mxu0
        %675 = vst [vmem:[%s263] sm:$0xff] %v637
        %676 = vst [vmem:[%s263 + $0x8] sm:$0xff] %v642
        %677 = vst [vmem:[%s263 + $0x10] sm:$0xff] %v647
        %678 = vst [vmem:[%s263 + $0x18] sm:$0xff] %v652
        %679 = vst [vmem:[%s263 + $0x20] sm:$0xff] %v657
        %680 = vst [vmem:[%s263 + $0x28] sm:$0xff] %v662
        %681 = vst [vmem:[%s263 + $0x30] sm:$0xff] %v667
        %682 = vst [vmem:[%s263 + $0x38] sm:$0xff] %v672
        %s683 = sand.u32 %s121, 1
        %s684 = scalar_lea.sflag [#allocation3], %s683
        %s685 = sand.u32 %s121, 1
        %s686 = smul.addr %s685, 64
        %s687 = scalar_lea.vmem [#allocation2], %s686
        %s688 = smul.u32 8, %s24
        %p689 = scmp.lt.s32.totalorder %s688, 15
        %s690 = scalar_select %p689, %s688, 15
        %s691 = smul.addr %s690, 8
        %s692 = scalar_lea.vmem %s5, %s691
        %s693 = sand.u32 %s173, 1
        %s694 = scalar_lea.sflag [#allocation5], %s693
        %s695 = sand.u32 %s173, 1
        %s696 = smul.addr %s695, 64
        %s697 = scalar_lea.vmem [#allocation4], %s696
        // Predicated region
        $region37: #{tpu_custom_call.1} parent=35 // pred_check
          %p698 = pneg %p131
        $region38: #{tpu_custom_call.1} parent=35 // pred_check_branch
          %700 = sbr.rel (%p698) target = $region40
        $region39: #{tpu_custom_call.1} parent=35 // pred_region
          %s701 = smul.u32 8, %s24
          %s703 = ssub.s32 1024, 1024
          %704 = vsyncadd %s684, %s703
          %s705 = smul.addr %s701, 128
          %s706 = scalar_lea.hbm %s4, %s705
          %s707 = sshll.u32 %s687, 4
          %s708 = int_to_ptr.vmem [resolvable:$true] %s707
          %713 = dma.vmem_to_hbm [thread:$0]  %s708, 1024, %s706, %s684, 128, 128, 8
        $region40: #{tpu_custom_call.1} parent=35 // pred_fallthru
          _
        // Predicated region
        $region41: #{tpu_custom_call.1} parent=35 // pred_check
          %p714 = pneg %p157
        $region42: #{tpu_custom_call.1} parent=35 // pred_check_branch
          %716 = sbr.rel (%p714) target = $region44
        $region43: #{tpu_custom_call.1} parent=35 // pred_region
          %s717 = smul.u32 8, %s24
        $region44: #{tpu_custom_call.1} parent=35 // pred_fallthru
          _
        // Predicated region
        $region45: #{tpu_custom_call.1} parent=35 // pred_check
          %p718 = pneg %p183
        $region46: #{tpu_custom_call.1} parent=35 // pred_check_branch
          %720 = sbr.rel (%p718) target = $region48
        $region47: #{tpu_custom_call.1} parent=35 // pred_region
          %s721 = smul.u32 8, %s24
          %s723 = ssub.s32 1024, 1024
          %724 = vsyncadd %s694, %s723
          %s725 = smul.addr %s721, 128
          %s726 = scalar_lea.hbm %s6, %s725
          %s727 = sshll.u32 %s697, 4
          %s728 = int_to_ptr.vmem [resolvable:$true] %s727
          %733 = dma.vmem_to_hbm [thread:$0]  %s728, 1024, %s726, %s694, 128, 128, 8
        $region48: #{tpu_custom_call.1} parent=35 // pred_fallthru
          _
      $region36: #{tpu_custom_call.1} parent=5 // pred_fallthru
        _
      %p734 = scmp.le.s32.totalorder 2, %s19
      // Predicated region
      $region49: #{tpu_custom_call.1} parent=5 // pred_check
        %p735 = pneg %p734
      $region50: #{tpu_custom_call.1} parent=5 // pred_check_branch
        %737 = sbr.rel (%p735) target = $region52
      $region51: #{tpu_custom_call.1} parent=5 // pred_region
        %s738 = ssub.s32 %s19, 2
        // Predicated region
        $region53: #{tpu_custom_call.1} parent=51 // pred_check
          %p739 = pneg %p137
        $region54: #{tpu_custom_call.1} parent=51 // pred_check_branch
          %741 = sbr.rel (%p739) target = $region56
        $region55: #{tpu_custom_call.1} parent=51 // pred_region
          %s742 = sand.u32 %s122, 1
          %s743 = scalar_lea.sflag [#allocation3], %s742
          %s744 = sand.u32 %s122, 1
          %s745 = smul.addr %s744, 64
          %s746 = scalar_lea.vmem [#allocation2], %s745
          %747 = dma.done %s743, 1024
        $region56: #{tpu_custom_call.1} parent=51 // pred_fallthru
          _
        // Predicated region
        $region57: #{tpu_custom_call.1} parent=51 // pred_check
          %p748 = pneg %p163
        $region58: #{tpu_custom_call.1} parent=51 // pred_check_branch
          %750 = sbr.rel (%p748) target = $region60
        $region59: #{tpu_custom_call.1} parent=51 // pred_region
          %s751 = smul.u32 8, %s25
          %p752 = scmp.lt.s32.totalorder %s751, 15
          %s753 = scalar_select %p752, %s751, 15
          %s754 = smul.addr %s753, 8
          %s755 = scalar_lea.vmem %s5, %s754
        $region60: #{tpu_custom_call.1} parent=51 // pred_fallthru
          _
        // Predicated region
        $region61: #{tpu_custom_call.1} parent=51 // pred_check
          %p756 = pneg %p189
        $region62: #{tpu_custom_call.1} parent=51 // pred_check_branch
          %758 = sbr.rel (%p756) target = $region64
        $region63: #{tpu_custom_call.1} parent=51 // pred_region
          %s759 = sand.u32 %s174, 1
          %s760 = scalar_lea.sflag [#allocation5], %s759
          %s761 = sand.u32 %s174, 1
          %s762 = smul.addr %s761, 64
          %s763 = scalar_lea.vmem [#allocation4], %s762
          %764 = dma.done %s760, 1024
        $region64: #{tpu_custom_call.1} parent=51 // pred_fallthru
          _
      $region52: #{tpu_custom_call.1} parent=5 // pred_fallthru
        _
    $region6: #{tpu_custom_call.1} parent=1 // loop_footer
      %s23 = sadd.s32 1, %s19
    $region7: #{tpu_custom_call.1} parent=1 // loop_footer_branch
      %18 = sbr.rel target = $region3
    $region8: #{tpu_custom_call.1} parent=1 // loop_exit
      _
    %765 = vsyncpa [#allocation3], 1
    %s766 = scalar_lea.sflag [#allocation3], 1
    %767 = vsyncpa %s766, 1
    %768 = vsyncpa [#allocation5], 1
    %s769 = scalar_lea.sflag [#allocation5], 1
    %770 = vsyncpa %s769, 1

</llo_original>
